<compile_context>
chip_gen: v7x
topology: tpu7x:2x2x1
jax: 0.10.0
libtpu: 0.0.40
codegen_flags: <defaults>
</compile_context>

<pallas_src>
import jax
import jax.numpy as jnp
from jax.experimental import pallas as pl
from jax.experimental.pallas import tpu as pltpu

EPS = 1e-5
LANE = 128


def _bn_train(x, gamma, beta):
    """Training-mode BatchNorm1d fused into one scale/shift per element."""
    mu = jnp.mean(x, axis=0, keepdims=True)
    d = x - mu
    var = jnp.mean(d * d, axis=0, keepdims=True)
    s = gamma * jax.lax.rsqrt(var + EPS)     # rsqrt -> EUP slot (free)
    t = beta - mu * s
    return x * s + t                          # 2 VPU ops per element


def weighted_q_kernel(x_ref,
                      g_in_ref, b_in_ref,
                      w1_ref, b1_ref,
                      w2_ref, b2_ref,
                      w3_ref, b3_ref,
                      w4_ref, b4_ref,
                      g_h_ref, b_h_ref,
                      w5_ref, b5_ref,
                      out_ref):
    x = x_ref[...]

    # input_norm (BatchNorm1d over n_observations, training mode)
    x = _bn_train(x, g_in_ref[...], b_in_ref[...])

    # layer1 + relu  (kept as z1 for the residual)
    z1 = jnp.maximum(
        jnp.dot(x, w1_ref[...], preferred_element_type=jnp.float32) + b1_ref[...],
        0.0)
    # layer2 + relu
    y = jnp.maximum(
        jnp.dot(z1, w2_ref[...], preferred_element_type=jnp.float32) + b2_ref[...],
        0.0)
    # layer3 + relu
    y = jnp.maximum(
        jnp.dot(y, w3_ref[...], preferred_element_type=jnp.float32) + b3_ref[...],
        0.0)
    # residual: z = z1 + relu(layer4(y))
    z = z1 + jnp.maximum(
        jnp.dot(y, w4_ref[...], preferred_element_type=jnp.float32) + b4_ref[...],
        0.0)

    # norm (BatchNorm1d over hidden, training mode)
    z = _bn_train(z, g_h_ref[...], b_h_ref[...])

    # final_layer, zero-padded to a 128-lane-dense output slab (unmasked vst).
    out_ref[...] = (
        jnp.dot(z, w5_ref[...], preferred_element_type=jnp.float32) + b5_ref[...]
    )


def weighted_q_forward(x, params, n_actions, reward_size):
    """x: (B, n_obs) float32 -> (B, n_actions, reward_size) float32."""
    B, n_obs = x.shape
    hidden = params["w1"].shape[1]
    out_dim = n_actions * reward_size
    out_pad = max(LANE, pl.cdiv(out_dim, LANE) * LANE)   # lane-dense output width

    # Zero-pad the final projection so the output block is lane-dense.
    w5 = jnp.pad(params["w5"], ((0, 0), (0, out_pad - out_dim)))
    b5 = jnp.pad(params["b5"], ((0, 0), (0, out_pad - out_dim)))

    args = (
        x,
        params["g_in"], params["b_in"],
        params["w1"], params["b1"],
        params["w2"], params["b2"],
        params["w3"], params["b3"],
        params["w4"], params["b4"],
        params["g_h"], params["b_h"],
        w5, b5,
    )

    # Whole problem fits comfortably in VMEM (< 1 MiB): single grid point,
    # full-array blocks, everything resident. No block_shape / index_map
    # needed (avoids the old late-binding lambda bug).
    in_specs = [pl.BlockSpec(memory_space=pltpu.VMEM) for _ in args]
    out_spec = pl.BlockSpec(memory_space=pltpu.VMEM)

    flops = 2 * B * (n_obs * hidden + 3 * hidden * hidden + hidden * out_pad)
    bytes_accessed = sum(int(a.size) * a.dtype.itemsize for a in args) \
        + B * out_pad * 4
    cost = pl.CostEstimate(flops=flops,
                           transcendentals=n_obs + hidden,   # 2 rsqrt rows
                           bytes_accessed=bytes_accessed)

    flat = pl.pallas_call(
        weighted_q_kernel,
        out_shape=jax.ShapeDtypeStruct((B, out_pad), jnp.float32),
        in_specs=in_specs,
        out_specs=out_spec,
        cost_estimate=cost,
    )(*args)

    return flat[:, :out_dim].reshape(B, n_actions, reward_size)


def init_params(key, n_obs, hidden, n_actions, reward_size):
    """Deterministic init mimicking PyTorch nn.Linear / BatchNorm1d defaults."""
    def linear(key, fan_in, fan_out):
        kw, kb = jax.random.split(key)
        bound = 1.0 / jnp.sqrt(fan_in)
        w = jax.random.uniform(kw, (fan_in, fan_out), jnp.float32, -bound, bound)
        b = jax.random.uniform(kb, (1, fan_out), jnp.float32, -bound, bound)
        return w, b

    keys = jax.random.split(key, 5)
    w1, b1 = linear(keys[0], n_obs, hidden)
    w2, b2 = linear(keys[1], hidden, hidden)
    w3, b3 = linear(keys[2], hidden, hidden)
    w4, b4 = linear(keys[3], hidden, hidden)
    w5, b5 = linear(keys[4], hidden, n_actions * reward_size)

    return {
        "g_in": jnp.ones((1, n_obs), jnp.float32),
        "b_in": jnp.zeros((1, n_obs), jnp.float32),
        "w1": w1, "b1": b1,
        "w2": w2, "b2": b2,
        "w3": w3, "b3": b3,
        "w4": w4, "b4": b4,
        "g_h": jnp.ones((1, hidden), jnp.float32),
        "b_h": jnp.zeros((1, hidden), jnp.float32),
        "w5": w5, "b5": b5,
    }


def reference_forward(x, p, n_actions, reward_size):
    """Pure-JAX reference replicating the PyTorch forward (training-mode BN)."""
    def bn(v, g, b):
        mu = jnp.mean(v, axis=0, keepdims=True)
        var = jnp.mean((v - mu) ** 2, axis=0, keepdims=True)
        return (v - mu) / jnp.sqrt(var + EPS) * g + b

    x = bn(x, p["g_in"], p["b_in"])
    z1 = jax.nn.relu(x @ p["w1"] + p["b1"])
    y = jax.nn.relu(z1 @ p["w2"] + p["b2"])
    y = jax.nn.relu(y @ p["w3"] + p["b3"])
    z = z1 + jax.nn.relu(y @ p["w4"] + p["b4"])
    z = bn(z, p["g_h"], p["b_h"])
    out = z @ p["w5"] + p["b5"]
    return out.reshape(-1, n_actions, reward_size)


if __name__ == "__main__":
    n_obs, hidden = 32, 128
    n_actions, reward_size = 4, 3
    batch = 8

    key = jax.random.PRNGKey(0)
    k_x, k_p = jax.random.split(key)
    x = jax.random.normal(k_x, (batch, n_obs), jnp.float32)
    params = init_params(k_p, n_obs, hidden, n_actions, reward_size)

    out = weighted_q_forward(x, params, n_actions, reward_size)
    out = jax.block_until_ready(out)

    ref = reference_forward(x, params, n_actions, reward_size)
    assert out.shape == (batch, n_actions, reward_size)
    assert jnp.allclose(out, ref, atol=1e-4, rtol=1e-4)

    print("KERNEL_OK")
</pallas_src>

<mosaic_0001>
module attributes {stable_mosaic.version = 11 : i64} {
  func.func @weighted_q_kernel(%arg0: memref<8x32xf32, #tpu.memory_space<vmem>>, %arg1: memref<1x32xf32, #tpu.memory_space<vmem>>, %arg2: memref<1x32xf32, #tpu.memory_space<vmem>>, %arg3: memref<32x128xf32, #tpu.memory_space<vmem>>, %arg4: memref<1x128xf32, #tpu.memory_space<vmem>>, %arg5: memref<128x128xf32, #tpu.memory_space<vmem>>, %arg6: memref<1x128xf32, #tpu.memory_space<vmem>>, %arg7: memref<128x128xf32, #tpu.memory_space<vmem>>, %arg8: memref<1x128xf32, #tpu.memory_space<vmem>>, %arg9: memref<128x128xf32, #tpu.memory_space<vmem>>, %arg10: memref<1x128xf32, #tpu.memory_space<vmem>>, %arg11: memref<1x128xf32, #tpu.memory_space<vmem>>, %arg12: memref<1x128xf32, #tpu.memory_space<vmem>>, %arg13: memref<128x128xf32, #tpu.memory_space<vmem>>, %arg14: memref<1x128xf32, #tpu.memory_space<vmem>>, %arg15: memref<8x128xf32, #tpu.memory_space<vmem>>) attributes {dimension_semantics = [], scalar_prefetch = 0 : i64, scratch_operands = 0 : i64, tpu.core_type = #tpu.core_type<tc>} {
    %c0 = arith.constant 0 : index
    %c0_0 = arith.constant 0 : index
    %0 = vector.load %arg0[%c0, %c0_0] : memref<8x32xf32, #tpu.memory_space<vmem>>, vector<8x32xf32>
    %c0_1 = arith.constant 0 : index
    %c0_2 = arith.constant 0 : index
    %1 = vector.load %arg1[%c0_1, %c0_2] : memref<1x32xf32, #tpu.memory_space<vmem>>, vector<1x32xf32>
    %c0_3 = arith.constant 0 : index
    %c0_4 = arith.constant 0 : index
    %2 = vector.load %arg2[%c0_3, %c0_4] : memref<1x32xf32, #tpu.memory_space<vmem>>, vector<1x32xf32>
    %cst = arith.constant dense<0.000000e+00> : vector<32xf32>
    %3 = vector.multi_reduction <add>, %0, %cst [0] : vector<8x32xf32> to vector<32xf32>
    %4 = vector.shape_cast %3 : vector<32xf32> to vector<1x32xf32>
    %cst_5 = arith.constant 8.000000e+00 : f32
    %5 = vector.broadcast %cst_5 : f32 to vector<1x32xf32>
    %6 = arith.divf %4, %5 : vector<1x32xf32>
    %7 = vector.broadcast %6 : vector<1x32xf32> to vector<8x32xf32>
    %8 = arith.subf %0, %7 : vector<8x32xf32>
    %9 = arith.mulf %8, %8 : vector<8x32xf32>
    %cst_6 = arith.constant dense<0.000000e+00> : vector<32xf32>
    %10 = vector.multi_reduction <add>, %9, %cst_6 [0] : vector<8x32xf32> to vector<32xf32>
    %11 = vector.shape_cast %10 : vector<32xf32> to vector<1x32xf32>
    %cst_7 = arith.constant 8.000000e+00 : f32
    %12 = vector.broadcast %cst_7 : f32 to vector<1x32xf32>
    %13 = arith.divf %11, %12 : vector<1x32xf32>
    %cst_8 = arith.constant 9.99999974E-6 : f32
    %14 = vector.broadcast %cst_8 : f32 to vector<1x32xf32>
    %15 = arith.addf %13, %14 : vector<1x32xf32>
    %16 = math.rsqrt %15 : vector<1x32xf32>
    %17 = arith.mulf %1, %16 : vector<1x32xf32>
    %18 = arith.mulf %6, %17 : vector<1x32xf32>
    %19 = arith.subf %2, %18 : vector<1x32xf32>
    %20 = vector.broadcast %17 : vector<1x32xf32> to vector<8x32xf32>
    %21 = arith.mulf %0, %20 : vector<8x32xf32>
    %22 = vector.broadcast %19 : vector<1x32xf32> to vector<8x32xf32>
    %23 = arith.addf %21, %22 : vector<8x32xf32>
    %c0_9 = arith.constant 0 : index
    %c0_10 = arith.constant 0 : index
    %24 = vector.load %arg3[%c0_9, %c0_10] : memref<32x128xf32, #tpu.memory_space<vmem>>, vector<32x128xf32>
    %cst_11 = arith.constant dense<0.000000e+00> : vector<8x128xf32>
    %25 = tpu.matmul %23, %24, %cst_11 {dimension_numbers = #tpu.dot_dimension_numbers<[1], [0], [0], [1], [0, 0, 1, 1], [], []>} : vector<8x32xf32>, vector<32x128xf32>, vector<8x128xf32> -> vector<8x128xf32>
    %c0_12 = arith.constant 0 : index
    %c0_13 = arith.constant 0 : index
    %26 = vector.load %arg4[%c0_12, %c0_13] : memref<1x128xf32, #tpu.memory_space<vmem>>, vector<1x128xf32>
    %27 = vector.broadcast %26 : vector<1x128xf32> to vector<8x128xf32>
    %28 = arith.addf %25, %27 : vector<8x128xf32>
    %cst_14 = arith.constant 0.000000e+00 : f32
    %29 = vector.broadcast %cst_14 : f32 to vector<8x128xf32>
    %30 = arith.maximumf %28, %29 : vector<8x128xf32>
    %c0_15 = arith.constant 0 : index
    %c0_16 = arith.constant 0 : index
    %31 = vector.load %arg5[%c0_15, %c0_16] : memref<128x128xf32, #tpu.memory_space<vmem>>, vector<128x128xf32>
    %cst_17 = arith.constant dense<0.000000e+00> : vector<8x128xf32>
    %32 = tpu.matmul %30, %31, %cst_17 {dimension_numbers = #tpu.dot_dimension_numbers<[1], [0], [0], [1], [0, 0, 1, 1], [], []>} : vector<8x128xf32>, vector<128x128xf32>, vector<8x128xf32> -> vector<8x128xf32>
    %c0_18 = arith.constant 0 : index
    %c0_19 = arith.constant 0 : index
    %33 = vector.load %arg6[%c0_18, %c0_19] : memref<1x128xf32, #tpu.memory_space<vmem>>, vector<1x128xf32>
    %34 = vector.broadcast %33 : vector<1x128xf32> to vector<8x128xf32>
    %35 = arith.addf %32, %34 : vector<8x128xf32>
    %cst_20 = arith.constant 0.000000e+00 : f32
    %36 = vector.broadcast %cst_20 : f32 to vector<8x128xf32>
    %37 = arith.maximumf %35, %36 : vector<8x128xf32>
    %c0_21 = arith.constant 0 : index
    %c0_22 = arith.constant 0 : index
    %38 = vector.load %arg7[%c0_21, %c0_22] : memref<128x128xf32, #tpu.memory_space<vmem>>, vector<128x128xf32>
    %cst_23 = arith.constant dense<0.000000e+00> : vector<8x128xf32>
    %39 = tpu.matmul %37, %38, %cst_23 {dimension_numbers = #tpu.dot_dimension_numbers<[1], [0], [0], [1], [0, 0, 1, 1], [], []>} : vector<8x128xf32>, vector<128x128xf32>, vector<8x128xf32> -> vector<8x128xf32>
    %c0_24 = arith.constant 0 : index
    %c0_25 = arith.constant 0 : index
    %40 = vector.load %arg8[%c0_24, %c0_25] : memref<1x128xf32, #tpu.memory_space<vmem>>, vector<1x128xf32>
    %41 = vector.broadcast %40 : vector<1x128xf32> to vector<8x128xf32>
    %42 = arith.addf %39, %41 : vector<8x128xf32>
    %cst_26 = arith.constant 0.000000e+00 : f32
    %43 = vector.broadcast %cst_26 : f32 to vector<8x128xf32>
    %44 = arith.maximumf %42, %43 : vector<8x128xf32>
    %c0_27 = arith.constant 0 : index
    %c0_28 = arith.constant 0 : index
    %45 = vector.load %arg9[%c0_27, %c0_28] : memref<128x128xf32, #tpu.memory_space<vmem>>, vector<128x128xf32>
    %cst_29 = arith.constant dense<0.000000e+00> : vector<8x128xf32>
    %46 = tpu.matmul %44, %45, %cst_29 {dimension_numbers = #tpu.dot_dimension_numbers<[1], [0], [0], [1], [0, 0, 1, 1], [], []>} : vector<8x128xf32>, vector<128x128xf32>, vector<8x128xf32> -> vector<8x128xf32>
    %c0_30 = arith.constant 0 : index
    %c0_31 = arith.constant 0 : index
    %47 = vector.load %arg10[%c0_30, %c0_31] : memref<1x128xf32, #tpu.memory_space<vmem>>, vector<1x128xf32>
    %48 = vector.broadcast %47 : vector<1x128xf32> to vector<8x128xf32>
    %49 = arith.addf %46, %48 : vector<8x128xf32>
    %cst_32 = arith.constant 0.000000e+00 : f32
    %50 = vector.broadcast %cst_32 : f32 to vector<8x128xf32>
    %51 = arith.maximumf %49, %50 : vector<8x128xf32>
    %52 = arith.addf %30, %51 : vector<8x128xf32>
    %c0_33 = arith.constant 0 : index
    %c0_34 = arith.constant 0 : index
    %53 = vector.load %arg11[%c0_33, %c0_34] : memref<1x128xf32, #tpu.memory_space<vmem>>, vector<1x128xf32>
    %c0_35 = arith.constant 0 : index
    %c0_36 = arith.constant 0 : index
    %54 = vector.load %arg12[%c0_35, %c0_36] : memref<1x128xf32, #tpu.memory_space<vmem>>, vector<1x128xf32>
    %cst_37 = arith.constant dense<0.000000e+00> : vector<128xf32>
    %55 = vector.multi_reduction <add>, %52, %cst_37 [0] : vector<8x128xf32> to vector<128xf32>
    %56 = vector.shape_cast %55 : vector<128xf32> to vector<1x128xf32>
    %cst_38 = arith.constant 8.000000e+00 : f32
    %57 = vector.broadcast %cst_38 : f32 to vector<1x128xf32>
    %58 = arith.divf %56, %57 : vector<1x128xf32>
    %59 = vector.broadcast %58 : vector<1x128xf32> to vector<8x128xf32>
    %60 = arith.subf %52, %59 : vector<8x128xf32>
    %61 = arith.mulf %60, %60 : vector<8x128xf32>
    %cst_39 = arith.constant dense<0.000000e+00> : vector<128xf32>
    %62 = vector.multi_reduction <add>, %61, %cst_39 [0] : vector<8x128xf32> to vector<128xf32>
    %63 = vector.shape_cast %62 : vector<128xf32> to vector<1x128xf32>
    %cst_40 = arith.constant 8.000000e+00 : f32
    %64 = vector.broadcast %cst_40 : f32 to vector<1x128xf32>
    %65 = arith.divf %63, %64 : vector<1x128xf32>
    %cst_41 = arith.constant 9.99999974E-6 : f32
    %66 = vector.broadcast %cst_41 : f32 to vector<1x128xf32>
    %67 = arith.addf %65, %66 : vector<1x128xf32>
    %68 = math.rsqrt %67 : vector<1x128xf32>
    %69 = arith.mulf %53, %68 : vector<1x128xf32>
    %70 = arith.mulf %58, %69 : vector<1x128xf32>
    %71 = arith.subf %54, %70 : vector<1x128xf32>
    %72 = vector.broadcast %69 : vector<1x128xf32> to vector<8x128xf32>
    %73 = arith.mulf %52, %72 : vector<8x128xf32>
    %74 = vector.broadcast %71 : vector<1x128xf32> to vector<8x128xf32>
    %75 = arith.addf %73, %74 : vector<8x128xf32>
    %c0_42 = arith.constant 0 : index
    %c0_43 = arith.constant 0 : index
    %76 = vector.load %arg13[%c0_42, %c0_43] : memref<128x128xf32, #tpu.memory_space<vmem>>, vector<128x128xf32>
    %cst_44 = arith.constant dense<0.000000e+00> : vector<8x128xf32>
    %77 = tpu.matmul %75, %76, %cst_44 {dimension_numbers = #tpu.dot_dimension_numbers<[1], [0], [0], [1], [0, 0, 1, 1], [], []>} : vector<8x128xf32>, vector<128x128xf32>, vector<8x128xf32> -> vector<8x128xf32>
    %c0_45 = arith.constant 0 : index
    %c0_46 = arith.constant 0 : index
    %78 = vector.load %arg14[%c0_45, %c0_46] : memref<1x128xf32, #tpu.memory_space<vmem>>, vector<1x128xf32>
    %79 = vector.broadcast %78 : vector<1x128xf32> to vector<8x128xf32>
    %80 = arith.addf %77, %79 : vector<8x128xf32>
    %c0_47 = arith.constant 0 : index
    %c0_48 = arith.constant 0 : index
    %81 = vector.load %arg15[%c0_47, %c0_48] : memref<8x128xf32, #tpu.memory_space<vmem>>, vector<8x128xf32>
    tpu.vector_store %arg15[%c0_47, %c0_48], %80 {strides = array<i32>} : memref<8x128xf32, #tpu.memory_space<vmem>>, vector<8x128xf32>,
    return
  }
}

</mosaic_0001>

<llo_original>
// kernel: tpu_custom_call.1
$region0: #{tpu_custom_call.1}
  #allocation0 [shape = 'u32[]', space=smem, size = 0x4, offset = 0x4, fixed_abs, tag = 'smem constant byte address 0x4 - core index']
  #allocation1 [shape = 'u32[144,128]{1,0:T(1,128)}', space=vmem, size = 0x12000, scoped, tag = 'internal scratch']
  %s0 = inlined_call_operand.hbm [shape: f32[8,32], index: 0, kind: input, shape index: {}]
  %s1 = inlined_call_operand.vmem [shape: f32[1,32], index: 1, kind: input, shape index: {}]
  %s2 = inlined_call_operand.vmem [shape: f32[1,32], index: 2, kind: input, shape index: {}]
  %s3 = inlined_call_operand.hbm [shape: f32[32,128], index: 3, kind: input, shape index: {}]
  %s4 = inlined_call_operand.vmem [shape: f32[1,128], index: 4, kind: input, shape index: {}]
  %s5 = inlined_call_operand.hbm [shape: f32[128,128], index: 5, kind: input, shape index: {}]
  %s6 = inlined_call_operand.vmem [shape: f32[1,128], index: 6, kind: input, shape index: {}]
  %s7 = inlined_call_operand.hbm [shape: f32[128,128], index: 7, kind: input, shape index: {}]
  %s8 = inlined_call_operand.vmem [shape: f32[1,128], index: 8, kind: input, shape index: {}]
  %s9 = inlined_call_operand.hbm [shape: f32[128,128], index: 9, kind: input, shape index: {}]
  %s10 = inlined_call_operand.vmem [shape: f32[1,128], index: 10, kind: input, shape index: {}]
  %s11 = inlined_call_operand.vmem [shape: f32[1,128], index: 11, kind: input, shape index: {}]
  %s12 = inlined_call_operand.vmem [shape: f32[1,128], index: 12, kind: input, shape index: {}]
  %s13 = inlined_call_operand.hbm [shape: f32[128,128], index: 13, kind: input, shape index: {}]
  %s14 = inlined_call_operand.vmem [shape: f32[1,128], index: 14, kind: input, shape index: {}]
  %s15 = inlined_call_operand.hbm [shape: f32[8,128], index: 15, kind: output, shape index: {}]
  %s16 = sld [smem:[#allocation0]]
  $region94: #{tpu_custom_call.1} parent=0
    _
  %s18 = ssub.s32 1, %s16
  %s19 = scalar_select 0, %s18, %s16
  $region1: #{tpu_custom_call.1} parent=0
    #allocation2 [shape = 'u8[4096]{0}', space=vmem, size = 0x1000, scoped, tag = 'input window, operand 0, single buffered']
    #allocation3 [shape = 's32[1]{0}', space=sflag, size = 0x4, scoped, tag = 'scoped memory for tpu_custom_call.1']
    #allocation4 [shape = 's32[1]{0}', space=sflag, size = 0x4, scoped, tag = 'scoped memory for tpu_custom_call.1']
    #allocation5 [shape = 'u8[16384]{0}', space=vmem, size = 0x4000, scoped, tag = 'input window, operand 3, single buffered']
    #allocation6 [shape = 's32[1]{0}', space=sflag, size = 0x4, scoped, tag = 'scoped memory for tpu_custom_call.1']
    #allocation7 [shape = 'u8[65536]{0}', space=vmem, size = 0x10000, scoped, tag = 'input window, operand 5, single buffered']
    #allocation8 [shape = 'u8[65536]{0}', space=vmem, size = 0x10000, scoped, tag = 'input window, operand 7, single buffered']
    #allocation9 [shape = 's32[1]{0}', space=sflag, size = 0x4, scoped, tag = 'scoped memory for tpu_custom_call.1']
    #allocation10 [shape = 'u8[65536]{0}', space=vmem, size = 0x10000, scoped, tag = 'input window, operand 9, single buffered']
    #allocation11 [shape = 'u8[65536]{0}', space=vmem, size = 0x10000, scoped, tag = 'input window, operand 13, single buffered']
    #allocation12 [shape = 's32[1]{0}', space=sflag, size = 0x4, scoped, tag = 'scoped memory for tpu_custom_call.1']
    #allocation13 [shape = 'u8[4096]{0}', space=vmem, size = 0x1000, scoped, tag = 'output window, operand 0, single buffered']
    %20 = vsyncpa [#allocation3], 0
    %21 = vsyncpa [#allocation6], 0
    %22 = vsyncpa [#allocation9], 0
    %23 = vsyncpa [#allocation12], 0
    %24 = vsyncpa [#allocation4], 0
    // Predicated region
    $region2: #{tpu_custom_call.1} parent=1 // pred_check
      _
    $region3: #{tpu_custom_call.1} parent=1 // pred_check_branch
      %26 = sbr.rel (0) target = $region5
    $region4: #{tpu_custom_call.1} parent=1 // pred_region
      %s28 = ssub.s32 128, 128
      %29 = vsyncadd [#allocation3], %s28
      %s31 = sshll.u32 [#allocation2], 4
      %s32 = int_to_ptr.vmem [resolvable:$true] %s31
      %34 = dma.hbm_to_vmem [thread:$0]  %s0, 128, %s32, [#allocation3]
    $region5: #{tpu_custom_call.1} parent=1 // pred_fallthru
      _
    // Predicated region
    $region6: #{tpu_custom_call.1} parent=1 // pred_check
      _
    $region7: #{tpu_custom_call.1} parent=1 // pred_check_branch
      %36 = sbr.rel (0) target = $region9
    $region8: #{tpu_custom_call.1} parent=1 // pred_region
      _
    $region9: #{tpu_custom_call.1} parent=1 // pred_fallthru
      _
    // Predicated region
    $region10: #{tpu_custom_call.1} parent=1 // pred_check
      _
    $region11: #{tpu_custom_call.1} parent=1 // pred_check_branch
      %38 = sbr.rel (0) target = $region13
    $region12: #{tpu_custom_call.1} parent=1 // pred_region
      _
    $region13: #{tpu_custom_call.1} parent=1 // pred_fallthru
      _
    // Predicated region
    $region14: #{tpu_custom_call.1} parent=1 // pred_check
      _
    $region15: #{tpu_custom_call.1} parent=1 // pred_check_branch
      %40 = sbr.rel (0) target = $region17
    $region16: #{tpu_custom_call.1} parent=1 // pred_region
      %s42 = ssub.s32 512, 512
      %43 = vsyncadd [#allocation6], %s42
      %s44 = sshll.u32 [#allocation5], 4
      %s45 = int_to_ptr.vmem [resolvable:$true] %s44
      %50 = dma.hbm_to_vmem [thread:$0]  %s3, 512, %s45, [#allocation6], 128, 128, 8
    $region17: #{tpu_custom_call.1} parent=1 // pred_fallthru
      _
    // Predicated region
    $region18: #{tpu_custom_call.1} parent=1 // pred_check
      _
    $region19: #{tpu_custom_call.1} parent=1 // pred_check_branch
      %52 = sbr.rel (0) target = $region21
    $region20: #{tpu_custom_call.1} parent=1 // pred_region
      _
    $region21: #{tpu_custom_call.1} parent=1 // pred_fallthru
      _
    // Predicated region
    $region22: #{tpu_custom_call.1} parent=1 // pred_check
      _
    $region23: #{tpu_custom_call.1} parent=1 // pred_check_branch
      %54 = sbr.rel (0) target = $region25
    $region24: #{tpu_custom_call.1} parent=1 // pred_region
      %s56 = ssub.s32 2048, 2048
      %57 = vsyncadd [#allocation6], %s56
      %s58 = sshll.u32 [#allocation7], 4
      %s59 = int_to_ptr.vmem [resolvable:$true] %s58
      %64 = dma.hbm_to_vmem [thread:$0]  %s5, 2048, %s59, [#allocation6], 128, 128, 8
    $region25: #{tpu_custom_call.1} parent=1 // pred_fallthru
      _
    // Predicated region
    $region26: #{tpu_custom_call.1} parent=1 // pred_check
      _
    $region27: #{tpu_custom_call.1} parent=1 // pred_check_branch
      %66 = sbr.rel (0) target = $region29
    $region28: #{tpu_custom_call.1} parent=1 // pred_region
      _
    $region29: #{tpu_custom_call.1} parent=1 // pred_fallthru
      _
    // Predicated region
    $region30: #{tpu_custom_call.1} parent=1 // pred_check
      _
    $region31: #{tpu_custom_call.1} parent=1 // pred_check_branch
      %68 = sbr.rel (0) target = $region33
    $region32: #{tpu_custom_call.1} parent=1 // pred_region
      %s70 = ssub.s32 2048, 2048
      %71 = vsyncadd [#allocation9], %s70
      %s72 = sshll.u32 [#allocation8], 4
      %s73 = int_to_ptr.vmem [resolvable:$true] %s72
      %78 = dma.hbm_to_vmem [thread:$0]  %s7, 2048, %s73, [#allocation9], 128, 128, 8
    $region33: #{tpu_custom_call.1} parent=1 // pred_fallthru
      _
    // Predicated region
    $region34: #{tpu_custom_call.1} parent=1 // pred_check
      _
    $region35: #{tpu_custom_call.1} parent=1 // pred_check_branch
      %80 = sbr.rel (0) target = $region37
    $region36: #{tpu_custom_call.1} parent=1 // pred_region
      _
    $region37: #{tpu_custom_call.1} parent=1 // pred_fallthru
      _
    // Predicated region
    $region38: #{tpu_custom_call.1} parent=1 // pred_check
      _
    $region39: #{tpu_custom_call.1} parent=1 // pred_check_branch
      %82 = sbr.rel (0) target = $region41
    $region40: #{tpu_custom_call.1} parent=1 // pred_region
      %s84 = ssub.s32 2048, 2048
      %85 = vsyncadd [#allocation9], %s84
      %s86 = sshll.u32 [#allocation10], 4
      %s87 = int_to_ptr.vmem [resolvable:$true] %s86
      %92 = dma.hbm_to_vmem [thread:$0]  %s9, 2048, %s87, [#allocation9], 128, 128, 8
    $region41: #{tpu_custom_call.1} parent=1 // pred_fallthru
      _
    // Predicated region
    $region42: #{tpu_custom_call.1} parent=1 // pred_check
      _
    $region43: #{tpu_custom_call.1} parent=1 // pred_check_branch
      %94 = sbr.rel (0) target = $region45
    $region44: #{tpu_custom_call.1} parent=1 // pred_region
      _
    $region45: #{tpu_custom_call.1} parent=1 // pred_fallthru
      _
    // Predicated region
    $region46: #{tpu_custom_call.1} parent=1 // pred_check
      _
    $region47: #{tpu_custom_call.1} parent=1 // pred_check_branch
      %96 = sbr.rel (0) target = $region49
    $region48: #{tpu_custom_call.1} parent=1 // pred_region
      _
    $region49: #{tpu_custom_call.1} parent=1 // pred_fallthru
      _
    // Predicated region
    $region50: #{tpu_custom_call.1} parent=1 // pred_check
      _
    $region51: #{tpu_custom_call.1} parent=1 // pred_check_branch
      %98 = sbr.rel (0) target = $region53
    $region52: #{tpu_custom_call.1} parent=1 // pred_region
      _
    $region53: #{tpu_custom_call.1} parent=1 // pred_fallthru
      _
    // Predicated region
    $region54: #{tpu_custom_call.1} parent=1 // pred_check
      _
    $region55: #{tpu_custom_call.1} parent=1 // pred_check_branch
      %100 = sbr.rel (0) target = $region57
    $region56: #{tpu_custom_call.1} parent=1 // pred_region
      %s102 = ssub.s32 2048, 2048
      %103 = vsyncadd [#allocation12], %s102
      %s104 = sshll.u32 [#allocation11], 4
      %s105 = int_to_ptr.vmem [resolvable:$true] %s104
      %110 = dma.hbm_to_vmem [thread:$0]  %s13, 2048, %s105, [#allocation12], 128, 128, 8
    $region57: #{tpu_custom_call.1} parent=1 // pred_fallthru
      _
    // Predicated region
    $region58: #{tpu_custom_call.1} parent=1 // pred_check
      _
    $region59: #{tpu_custom_call.1} parent=1 // pred_check_branch
      %112 = sbr.rel (0) target = $region61
    $region60: #{tpu_custom_call.1} parent=1 // pred_region
      _
    $region61: #{tpu_custom_call.1} parent=1 // pred_fallthru
      _
    // Predicated region
    $region62: #{tpu_custom_call.1} parent=1 // pred_check
      _
    $region63: #{tpu_custom_call.1} parent=1 // pred_check_branch
      %114 = sbr.rel (0) target = $region65
    $region64: #{tpu_custom_call.1} parent=1 // pred_region
      %115 = dma.done [#allocation3], 128
    $region65: #{tpu_custom_call.1} parent=1 // pred_fallthru
      _
    // Predicated region
    $region66: #{tpu_custom_call.1} parent=1 // pred_check
      _
    $region67: #{tpu_custom_call.1} parent=1 // pred_check_branch
      %117 = sbr.rel (0) target = $region69
    $region68: #{tpu_custom_call.1} parent=1 // pred_region
      %118 = dma.done [#allocation6], 512
    $region69: #{tpu_custom_call.1} parent=1 // pred_fallthru
      _
    // Predicated region
    $region70: #{tpu_custom_call.1} parent=1 // pred_check
      _
    $region71: #{tpu_custom_call.1} parent=1 // pred_check_branch
      %120 = sbr.rel (0) target = $region73
    $region72: #{tpu_custom_call.1} parent=1 // pred_region
      %121 = dma.done [#allocation6], 2048
    $region73: #{tpu_custom_call.1} parent=1 // pred_fallthru
      _
    // Predicated region
    $region74: #{tpu_custom_call.1} parent=1 // pred_check
      _
    $region75: #{tpu_custom_call.1} parent=1 // pred_check_branch
      %123 = sbr.rel (0) target = $region77
    $region76: #{tpu_custom_call.1} parent=1 // pred_region
      %124 = dma.done [#allocation9], 2048
    $region77: #{tpu_custom_call.1} parent=1 // pred_fallthru
      _
    // Predicated region
    $region78: #{tpu_custom_call.1} parent=1 // pred_check
      _
    $region79: #{tpu_custom_call.1} parent=1 // pred_check_branch
      %126 = sbr.rel (0) target = $region81
    $region80: #{tpu_custom_call.1} parent=1 // pred_region
      %127 = dma.done [#allocation9], 2048
    $region81: #{tpu_custom_call.1} parent=1 // pred_fallthru
      _
    // Predicated region
    $region82: #{tpu_custom_call.1} parent=1 // pred_check
      _
    $region83: #{tpu_custom_call.1} parent=1 // pred_check_branch
      %129 = sbr.rel (0) target = $region85
    $region84: #{tpu_custom_call.1} parent=1 // pred_region
      %130 = dma.done [#allocation12], 2048
    $region85: #{tpu_custom_call.1} parent=1 // pred_fallthru
      _
    %v131 = vld [vmem:[#allocation2] sm:$0xff]
    %v132 = vld [vmem:[%s1] sm:$0x1]
    %v133 = vld [vmem:[%s2] sm:$0x1]
    %vm134 = vcmask 261120
    %v135 = vsel %vm134, %v131, 0.0
    %v136 = vrot.slane %v135, 4
    %v137 = vadd.f32 %v135, %v136
    %v138 = vrot.slane %v137, 2
    %v139 = vadd.f32 %v137, %v138
    %v140 = vrot.slane %v139, 1
    %v141 = vadd.f32 %v139, %v140
    %v142 = vrcp.pop 8.0
    %v143 = vmul.f32 %v141, %v142
    %v144 = vsub.f32 %v131, %v143
    %v145 = vmul.f32 %v144, %v144
    %v146 = vsel %vm134, %v145, 0.0
    %v147 = vrot.slane %v146, 4
    %v148 = vadd.f32 %v146, %v147
    %v149 = vrot.slane %v148, 2
    %v150 = vadd.f32 %v148, %v149
    %v151 = vrot.slane %v150, 1
    %v152 = vadd.f32 %v150, %v151
    %v153 = vmul.f32 %v152, %v142
    %v154 = vadd.f32 %v153, 1e-05
    %v155 = vrsqrt.pop %v154
    %v156 = vmul.f32 %v132, %v155
    %v157 = vmul.f32 %v143, %v156
    %v158 = vsub.f32 %v133, %v157
    %v160 = vlaneseq
    %v161 = vshrl.u32 %v160, 7
    %v162 = vsub.s32 0, %v161
    %v163 = vrot.slane %v156, %v162
    %v165 = vmul.f32 %v131, %v163
    %v167 = vlaneseq
    %v168 = vshrl.u32 %v167, 7
    %v169 = vsub.s32 0, %v168
    %v170 = vrot.slane %v158, %v169
    %v172 = vadd.f32 %v165, %v170
    %v173 = vld [vmem:[#allocation5] sm:$0xff]
    %v174 = vld [vmem:[#allocation5 + $0x8] sm:$0xff]
    %v175 = vld [vmem:[#allocation5 + $0x10] sm:$0xff]
    %v176 = vld [vmem:[#allocation5 + $0x18] sm:$0xff]
    %v177 = vld [vmem:[%s4] sm:$0x1]
    %v179 = vlaneseq
    %v180 = vshrl.u32 %v179, 7
    %v181 = vsub.s32 0, %v180
    %v182 = vrot.slane %v177, %v181
    %v185 = vsel %vm134, %v172, 0
    %187 = vmatprep.subr.mxu0 0.0
    %188 = vmatpush1.msra.mxu0 %v173
    %189 = vmatprep.subr.mxu0 0.0
    %190 = vmatpush1.msra.mxu0 %v174
    %191 = vmatprep.subr.mxu0 0.0
    %192 = vmatpush1.msra.mxu0 %v175
    %193 = vmatprep.subr.mxu0 0.0
    %194 = vmatpush1.msra.mxu0 %v176
    %195 = vmatprep.subr.mxu0 0.0
    %196 = vmatpush1.msra.mxu0 0.0
    %197 = vmatprep.subr.mxu0 0.0
    %198 = vmatpush1.msra.mxu0 0.0
    %199 = vmatprep.subr.mxu0 0.0
    %200 = vmatpush1.msra.mxu0 0.0
    %201 = vmatprep.subr.mxu0 0.0
    %202 = vmatpush1.msra.mxu0 0.0
    %203 = vmatprep.subr.mxu0 0.0
    %204 = vmatpush1.msra.mxu0 0.0
    %205 = vmatprep.subr.mxu0 0.0
    %206 = vmatpush1.msra.mxu0 0.0
    %207 = vmatprep.subr.mxu0 0.0
    %208 = vmatpush1.msra.mxu0 0.0
    %209 = vmatprep.subr.mxu0 0.0
    %210 = vmatpush1.msra.mxu0 0.0
    %211 = vmatprep.subr.mxu0 0.0
    %212 = vmatpush1.msra.mxu0 0.0
    %213 = vmatprep.subr.mxu0 0.0
    %214 = vmatpush1.msra.mxu0 0.0
    %215 = vmatprep.subr.mxu0 0.0
    %216 = vmatpush1.msra.mxu0 0.0
    %217 = vmatprep.subr.mxu0 0.0
    %218 = vmatpush1.msra.mxu0 0.0
    %219 = vmatprep.subr.mxu0 0.0
    %220 = vmatpush1.msra.mxu0 0.0
    %221 = vmatprep.subr.mxu0 0.0
    %222 = vmatpush1.msra.mxu0 0.0
    %223 = vmatprep.subr.mxu0 0.0
    %224 = vmatpush1.msra.mxu0 0.0
    %225 = vmatprep.subr.mxu0 0.0
    %226 = vmatpush1.msra.mxu0 0.0
    %227 = vmatprep.subr.mxu0 0.0
    %228 = vmatpush1.msra.mxu0 0.0
    %229 = vmatprep.subr.mxu0 0.0
    %230 = vmatpush1.msra.mxu0 0.0
    %231 = vmatprep.subr.mxu0 0.0
    %232 = vmatpush1.msra.mxu0 0.0
    %233 = vmatprep.subr.mxu0 0.0
    %234 = vmatpush1.msra.mxu0 0.0
    %235 = vmatprep.subr.mxu0 0.0
    %236 = vmatpush1.msra.mxu0 0.0
    %237 = vmatprep.subr.mxu0 0.0
    %238 = vmatpush1.msra.mxu0 0.0
    %239 = vmatprep.subr.mxu0 0.0
    %240 = vmatpush1.msra.mxu0 0.0
    %241 = vmatprep.subr.mxu0 0.0
    %242 = vmatpush1.msra.mxu0 0.0
    %243 = vmatprep.subr.mxu0 0.0
    %244 = vmatpush1.msra.mxu0 0.0
    %245 = vmatprep.subr.mxu0 0.0
    %246 = vmatpush1.msra.mxu0 0.0
    %247 = vmatprep.subr.mxu0 0.0
    %248 = vmatpush1.msra.mxu0 0.0
    %249 = vmatprep.subr.mxu0 0.0
    %250 = vmatpush1.msra.mxu0 0.0
    %251 = vmatprep.mubr.f32.mxu0 0.0
    %252 = vmatmul.mubr.f32.gmra.mrb[0].mxu0 %v185
    %v253 = vpop.f32.mrb[0].mxu0
    %v254 = vadd.f32 %v182, %v253
    %v255 = vpop.f32.mrb[0].mxu0
    %256 = vdwg.mxu0
    %v257 = vmax.f32 %v254, 0.0
    %v258 = vld [vmem:[#allocation7] sm:$0xff]
    %v259 = vld [vmem:[#allocation7 + $0x8] sm:$0xff]
    %v260 = vld [vmem:[#allocation7 + $0x10] sm:$0xff]
    %v261 = vld [vmem:[#allocation7 + $0x18] sm:$0xff]
    %v262 = vld [vmem:[#allocation7 + $0x20] sm:$0xff]
    %v263 = vld [vmem:[#allocation7 + $0x28] sm:$0xff]
    %v264 = vld [vmem:[#allocation7 + $0x30] sm:$0xff]
    %v265 = vld [vmem:[#allocation7 + $0x38] sm:$0xff]
    %v266 = vld [vmem:[#allocation7 + $0x40] sm:$0xff]
    %v267 = vld [vmem:[#allocation7 + $0x48] sm:$0xff]
    %v268 = vld [vmem:[#allocation7 + $0x50] sm:$0xff]
    %v269 = vld [vmem:[#allocation7 + $0x58] sm:$0xff]
    %v270 = vld [vmem:[#allocation7 + $0x60] sm:$0xff]
    %v271 = vld [vmem:[#allocation7 + $0x68] sm:$0xff]
    %v272 = vld [vmem:[#allocation7 + $0x70] sm:$0xff]
    %v273 = vld [vmem:[#allocation7 + $0x78] sm:$0xff]
    %v274 = vld [vmem:[%s6] sm:$0x1]
    %v276 = vlaneseq
    %v277 = vshrl.u32 %v276, 7
    %v278 = vsub.s32 0, %v277
    %v279 = vrot.slane %v274, %v278
    %281 = vmatprep.subr.mxu0 0.0
    %282 = vmatpush1.msra.mxu0 %v258
    %283 = vmatprep.subr.mxu0 0.0
    %284 = vmatpush1.msra.mxu0 %v259
    %285 = vmatprep.subr.mxu0 0.0
    %286 = vmatpush1.msra.mxu0 %v260
    %287 = vmatprep.subr.mxu0 0.0
    %288 = vmatpush1.msra.mxu0 %v261
    %289 = vmatprep.subr.mxu0 0.0
    %290 = vmatpush1.msra.mxu0 %v262
    %291 = vmatprep.subr.mxu0 0.0
    %292 = vmatpush1.msra.mxu0 %v263
    %293 = vmatprep.subr.mxu0 0.0
    %294 = vmatpush1.msra.mxu0 %v264
    %295 = vmatprep.subr.mxu0 0.0
    %296 = vmatpush1.msra.mxu0 %v265
    %297 = vmatprep.subr.mxu0 0.0
    %298 = vmatpush1.msra.mxu0 %v266
    %299 = vmatprep.subr.mxu0 0.0
    %300 = vmatpush1.msra.mxu0 %v267
    %301 = vmatprep.subr.mxu0 0.0
    %302 = vmatpush1.msra.mxu0 %v268
    %303 = vmatprep.subr.mxu0 0.0
    %304 = vmatpush1.msra.mxu0 %v269
    %305 = vmatprep.subr.mxu0 0.0
    %306 = vmatpush1.msra.mxu0 %v270
    %307 = vmatprep.subr.mxu0 0.0
    %308 = vmatpush1.msra.mxu0 %v271
    %309 = vmatprep.subr.mxu0 0.0
    %310 = vmatpush1.msra.mxu0 %v272
    %311 = vmatprep.subr.mxu0 0.0
    %312 = vmatpush1.msra.mxu0 %v273
    %313 = vmatprep.subr.mxu0 0.0
    %314 = vmatpush1.msra.mxu0 0.0
    %315 = vmatprep.subr.mxu0 0.0
    %316 = vmatpush1.msra.mxu0 0.0
    %317 = vmatprep.subr.mxu0 0.0
    %318 = vmatpush1.msra.mxu0 0.0
    %319 = vmatprep.subr.mxu0 0.0
    %320 = vmatpush1.msra.mxu0 0.0
    %321 = vmatprep.subr.mxu0 0.0
    %322 = vmatpush1.msra.mxu0 0.0
    %323 = vmatprep.subr.mxu0 0.0
    %324 = vmatpush1.msra.mxu0 0.0
    %325 = vmatprep.subr.mxu0 0.0
    %326 = vmatpush1.msra.mxu0 0.0
    %327 = vmatprep.subr.mxu0 0.0
    %328 = vmatpush1.msra.mxu0 0.0
    %329 = vmatprep.subr.mxu0 0.0
    %330 = vmatpush1.msra.mxu0 0.0
    %331 = vmatprep.subr.mxu0 0.0
    %332 = vmatpush1.msra.mxu0 0.0
    %333 = vmatprep.subr.mxu0 0.0
    %334 = vmatpush1.msra.mxu0 0.0
    %335 = vmatprep.subr.mxu0 0.0
    %336 = vmatpush1.msra.mxu0 0.0
    %337 = vmatprep.subr.mxu0 0.0
    %338 = vmatpush1.msra.mxu0 0.0
    %339 = vmatprep.subr.mxu0 0.0
    %340 = vmatpush1.msra.mxu0 0.0
    %341 = vmatprep.subr.mxu0 0.0
    %342 = vmatpush1.msra.mxu0 0.0
    %343 = vmatprep.subr.mxu0 0.0
    %344 = vmatpush1.msra.mxu0 0.0
    %345 = vmatprep.mubr.f32.mxu0 0.0
    %346 = vmatmul.mubr.f32.gmra.mrb[0].mxu0 %v257
    %v347 = vpop.f32.mrb[0].mxu0
    %v348 = vadd.f32 %v279, %v347
    %v349 = vpop.f32.mrb[0].mxu0
    %350 = vdwg.mxu0
    %v351 = vmax.f32 %v348, 0.0
    %v352 = vld [vmem:[#allocation8] sm:$0xff]
    %v353 = vld [vmem:[#allocation8 + $0x8] sm:$0xff]
    %v354 = vld [vmem:[#allocation8 + $0x10] sm:$0xff]
    %v355 = vld [vmem:[#allocation8 + $0x18] sm:$0xff]
    %v356 = vld [vmem:[#allocation8 + $0x20] sm:$0xff]
    %v357 = vld [vmem:[#allocation8 + $0x28] sm:$0xff]
    %v358 = vld [vmem:[#allocation8 + $0x30] sm:$0xff]
    %v359 = vld [vmem:[#allocation8 + $0x38] sm:$0xff]
    %v360 = vld [vmem:[#allocation8 + $0x40] sm:$0xff]
    %v361 = vld [vmem:[#allocation8 + $0x48] sm:$0xff]
    %v362 = vld [vmem:[#allocation8 + $0x50] sm:$0xff]
    %v363 = vld [vmem:[#allocation8 + $0x58] sm:$0xff]
    %v364 = vld [vmem:[#allocation8 + $0x60] sm:$0xff]
    %v365 = vld [vmem:[#allocation8 + $0x68] sm:$0xff]
    %v366 = vld [vmem:[#allocation8 + $0x70] sm:$0xff]
    %v367 = vld [vmem:[#allocation8 + $0x78] sm:$0xff]
    %v368 = vld [vmem:[%s8] sm:$0x1]
    %v370 = vlaneseq
    %v371 = vshrl.u32 %v370, 7
    %v372 = vsub.s32 0, %v371
    %v373 = vrot.slane %v368, %v372
    %375 = vmatprep.subr.mxu0 0.0
    %376 = vmatpush1.msra.mxu0 %v352
    %377 = vmatprep.subr.mxu0 0.0
    %378 = vmatpush1.msra.mxu0 %v353
    %379 = vmatprep.subr.mxu0 0.0
    %380 = vmatpush1.msra.mxu0 %v354
    %381 = vmatprep.subr.mxu0 0.0
    %382 = vmatpush1.msra.mxu0 %v355
    %383 = vmatprep.subr.mxu0 0.0
    %384 = vmatpush1.msra.mxu0 %v356
    %385 = vmatprep.subr.mxu0 0.0
    %386 = vmatpush1.msra.mxu0 %v357
    %387 = vmatprep.subr.mxu0 0.0
    %388 = vmatpush1.msra.mxu0 %v358
    %389 = vmatprep.subr.mxu0 0.0
    %390 = vmatpush1.msra.mxu0 %v359
    %391 = vmatprep.subr.mxu0 0.0
    %392 = vmatpush1.msra.mxu0 %v360
    %393 = vmatprep.subr.mxu0 0.0
    %394 = vmatpush1.msra.mxu0 %v361
    %395 = vmatprep.subr.mxu0 0.0
    %396 = vmatpush1.msra.mxu0 %v362
    %397 = vmatprep.subr.mxu0 0.0
    %398 = vmatpush1.msra.mxu0 %v363
    %399 = vmatprep.subr.mxu0 0.0
    %400 = vmatpush1.msra.mxu0 %v364
    %401 = vmatprep.subr.mxu0 0.0
    %402 = vmatpush1.msra.mxu0 %v365
    %403 = vmatprep.subr.mxu0 0.0
    %404 = vmatpush1.msra.mxu0 %v366
    %405 = vmatprep.subr.mxu0 0.0
    %406 = vmatpush1.msra.mxu0 %v367
    %407 = vmatprep.subr.mxu0 0.0
    %408 = vmatpush1.msra.mxu0 0.0
    %409 = vmatprep.subr.mxu0 0.0
    %410 = vmatpush1.msra.mxu0 0.0
    %411 = vmatprep.subr.mxu0 0.0
    %412 = vmatpush1.msra.mxu0 0.0
    %413 = vmatprep.subr.mxu0 0.0
    %414 = vmatpush1.msra.mxu0 0.0
    %415 = vmatprep.subr.mxu0 0.0
    %416 = vmatpush1.msra.mxu0 0.0
    %417 = vmatprep.subr.mxu0 0.0
    %418 = vmatpush1.msra.mxu0 0.0
    %419 = vmatprep.subr.mxu0 0.0
    %420 = vmatpush1.msra.mxu0 0.0
    %421 = vmatprep.subr.mxu0 0.0
    %422 = vmatpush1.msra.mxu0 0.0
    %423 = vmatprep.subr.mxu0 0.0
    %424 = vmatpush1.msra.mxu0 0.0
    %425 = vmatprep.subr.mxu0 0.0
    %426 = vmatpush1.msra.mxu0 0.0
    %427 = vmatprep.subr.mxu0 0.0
    %428 = vmatpush1.msra.mxu0 0.0
    %429 = vmatprep.subr.mxu0 0.0
    %430 = vmatpush1.msra.mxu0 0.0
    %431 = vmatprep.subr.mxu0 0.0
    %432 = vmatpush1.msra.mxu0 0.0
    %433 = vmatprep.subr.mxu0 0.0
    %434 = vmatpush1.msra.mxu0 0.0
    %435 = vmatprep.subr.mxu0 0.0
    %436 = vmatpush1.msra.mxu0 0.0
    %437 = vmatprep.subr.mxu0 0.0
    %438 = vmatpush1.msra.mxu0 0.0
    %439 = vmatprep.mubr.f32.mxu0 0.0
    %440 = vmatmul.mubr.f32.gmra.mrb[0].mxu0 %v351
    %v441 = vpop.f32.mrb[0].mxu0
    %v442 = vadd.f32 %v373, %v441
    %v443 = vpop.f32.mrb[0].mxu0
    %444 = vdwg.mxu0
    %v445 = vmax.f32 %v442, 0.0
    %v446 = vld [vmem:[#allocation10] sm:$0xff]
    %v447 = vld [vmem:[#allocation10 + $0x8] sm:$0xff]
    %v448 = vld [vmem:[#allocation10 + $0x10] sm:$0xff]
    %v449 = vld [vmem:[#allocation10 + $0x18] sm:$0xff]
    %v450 = vld [vmem:[#allocation10 + $0x20] sm:$0xff]
    %v451 = vld [vmem:[#allocation10 + $0x28] sm:$0xff]
    %v452 = vld [vmem:[#allocation10 + $0x30] sm:$0xff]
    %v453 = vld [vmem:[#allocation10 + $0x38] sm:$0xff]
    %v454 = vld [vmem:[#allocation10 + $0x40] sm:$0xff]
    %v455 = vld [vmem:[#allocation10 + $0x48] sm:$0xff]
    %v456 = vld [vmem:[#allocation10 + $0x50] sm:$0xff]
    %v457 = vld [vmem:[#allocation10 + $0x58] sm:$0xff]
    %v458 = vld [vmem:[#allocation10 + $0x60] sm:$0xff]
    %v459 = vld [vmem:[#allocation10 + $0x68] sm:$0xff]
    %v460 = vld [vmem:[#allocation10 + $0x70] sm:$0xff]
    %v461 = vld [vmem:[#allocation10 + $0x78] sm:$0xff]
    %v462 = vld [vmem:[%s10] sm:$0x1]
    %v464 = vlaneseq
    %v465 = vshrl.u32 %v464, 7
    %v466 = vsub.s32 0, %v465
    %v467 = vrot.slane %v462, %v466
    %469 = vmatprep.subr.mxu0 0.0
    %470 = vmatpush1.msra.mxu0 %v446
    %471 = vmatprep.subr.mxu0 0.0
    %472 = vmatpush1.msra.mxu0 %v447
    %473 = vmatprep.subr.mxu0 0.0
    %474 = vmatpush1.msra.mxu0 %v448
    %475 = vmatprep.subr.mxu0 0.0
    %476 = vmatpush1.msra.mxu0 %v449
    %477 = vmatprep.subr.mxu0 0.0
    %478 = vmatpush1.msra.mxu0 %v450
    %479 = vmatprep.subr.mxu0 0.0
    %480 = vmatpush1.msra.mxu0 %v451
    %481 = vmatprep.subr.mxu0 0.0
    %482 = vmatpush1.msra.mxu0 %v452
    %483 = vmatprep.subr.mxu0 0.0
    %484 = vmatpush1.msra.mxu0 %v453
    %485 = vmatprep.subr.mxu0 0.0
    %486 = vmatpush1.msra.mxu0 %v454
    %487 = vmatprep.subr.mxu0 0.0
    %488 = vmatpush1.msra.mxu0 %v455
    %489 = vmatprep.subr.mxu0 0.0
    %490 = vmatpush1.msra.mxu0 %v456
    %491 = vmatprep.subr.mxu0 0.0
    %492 = vmatpush1.msra.mxu0 %v457
    %493 = vmatprep.subr.mxu0 0.0
    %494 = vmatpush1.msra.mxu0 %v458
    %495 = vmatprep.subr.mxu0 0.0
    %496 = vmatpush1.msra.mxu0 %v459
    %497 = vmatprep.subr.mxu0 0.0
    %498 = vmatpush1.msra.mxu0 %v460
    %499 = vmatprep.subr.mxu0 0.0
    %500 = vmatpush1.msra.mxu0 %v461
    %501 = vmatprep.subr.mxu0 0.0
    %502 = vmatpush1.msra.mxu0 0.0
    %503 = vmatprep.subr.mxu0 0.0
    %504 = vmatpush1.msra.mxu0 0.0
    %505 = vmatprep.subr.mxu0 0.0
    %506 = vmatpush1.msra.mxu0 0.0
    %507 = vmatprep.subr.mxu0 0.0
    %508 = vmatpush1.msra.mxu0 0.0
    %509 = vmatprep.subr.mxu0 0.0
    %510 = vmatpush1.msra.mxu0 0.0
    %511 = vmatprep.subr.mxu0 0.0
    %512 = vmatpush1.msra.mxu0 0.0
    %513 = vmatprep.subr.mxu0 0.0
    %514 = vmatpush1.msra.mxu0 0.0
    %515 = vmatprep.subr.mxu0 0.0
    %516 = vmatpush1.msra.mxu0 0.0
    %517 = vmatprep.subr.mxu0 0.0
    %518 = vmatpush1.msra.mxu0 0.0
    %519 = vmatprep.subr.mxu0 0.0
    %520 = vmatpush1.msra.mxu0 0.0
    %521 = vmatprep.subr.mxu0 0.0
    %522 = vmatpush1.msra.mxu0 0.0
    %523 = vmatprep.subr.mxu0 0.0
    %524 = vmatpush1.msra.mxu0 0.0
    %525 = vmatprep.subr.mxu0 0.0
    %526 = vmatpush1.msra.mxu0 0.0
    %527 = vmatprep.subr.mxu0 0.0
    %528 = vmatpush1.msra.mxu0 0.0
    %529 = vmatprep.subr.mxu0 0.0
    %530 = vmatpush1.msra.mxu0 0.0
    %531 = vmatprep.subr.mxu0 0.0
    %532 = vmatpush1.msra.mxu0 0.0
    %533 = vmatprep.mubr.f32.mxu0 0.0
    %534 = vmatmul.mubr.f32.gmra.mrb[0].mxu0 %v445
    %v535 = vpop.f32.mrb[0].mxu0
    %v536 = vadd.f32 %v467, %v535
    %v537 = vpop.f32.mrb[0].mxu0
    %538 = vdwg.mxu0
    %v539 = vmax.f32 %v536, 0.0
    %v540 = vadd.f32 %v257, %v539
    %v541 = vld [vmem:[%s11] sm:$0x1]
    %v542 = vld [vmem:[%s12] sm:$0x1]
    %v543 = vrot.slane %v540, 4
    %v544 = vadd.f32 %v540, %v543
    %v545 = vrot.slane %v544, 2
    %v546 = vadd.f32 %v544, %v545
    %v547 = vrot.slane %v546, 1
    %v548 = vadd.f32 %v546, %v547
    %v549 = vmul.f32 %v548, %v142
    %v550 = vsub.f32 %v540, %v549
    %v551 = vmul.f32 %v550, %v550
    %v552 = vrot.slane %v551, 4
    %v553 = vadd.f32 %v551, %v552
    %v554 = vrot.slane %v553, 2
    %v555 = vadd.f32 %v553, %v554
    %v556 = vrot.slane %v555, 1
    %v557 = vadd.f32 %v555, %v556
    %v558 = vmul.f32 %v557, %v142
    %v559 = vadd.f32 %v558, 1e-05
    %v560 = vrsqrt.pop %v559
    %v561 = vmul.f32 %v541, %v560
    %v562 = vmul.f32 %v549, %v561
    %v563 = vsub.f32 %v542, %v562
    %v565 = vlaneseq
    %v566 = vshrl.u32 %v565, 7
    %v567 = vsub.s32 0, %v566
    %v568 = vrot.slane %v561, %v567
    %v570 = vmul.f32 %v540, %v568
    %v572 = vlaneseq
    %v573 = vshrl.u32 %v572, 7
    %v574 = vsub.s32 0, %v573
    %v575 = vrot.slane %v563, %v574
    %v577 = vadd.f32 %v570, %v575
    %v578 = vld [vmem:[#allocation11] sm:$0xff]
    %v579 = vld [vmem:[#allocation11 + $0x8] sm:$0xff]
    %v580 = vld [vmem:[#allocation11 + $0x10] sm:$0xff]
    %v581 = vld [vmem:[#allocation11 + $0x18] sm:$0xff]
    %v582 = vld [vmem:[#allocation11 + $0x20] sm:$0xff]
    %v583 = vld [vmem:[#allocation11 + $0x28] sm:$0xff]
    %v584 = vld [vmem:[#allocation11 + $0x30] sm:$0xff]
    %v585 = vld [vmem:[#allocation11 + $0x38] sm:$0xff]
    %v586 = vld [vmem:[#allocation11 + $0x40] sm:$0xff]
    %v587 = vld [vmem:[#allocation11 + $0x48] sm:$0xff]
    %v588 = vld [vmem:[#allocation11 + $0x50] sm:$0xff]
    %v589 = vld [vmem:[#allocation11 + $0x58] sm:$0xff]
    %v590 = vld [vmem:[#allocation11 + $0x60] sm:$0xff]
    %v591 = vld [vmem:[#allocation11 + $0x68] sm:$0xff]
    %v592 = vld [vmem:[#allocation11 + $0x70] sm:$0xff]
    %v593 = vld [vmem:[#allocation11 + $0x78] sm:$0xff]
    %v594 = vld [vmem:[%s14] sm:$0x1]
    %v596 = vlaneseq
    %v597 = vshrl.u32 %v596, 7
    %v598 = vsub.s32 0, %v597
    %v599 = vrot.slane %v594, %v598
    %601 = vmatprep.subr.mxu0 0.0
    %602 = vmatpush1.msra.mxu0 %v578
    %603 = vmatprep.subr.mxu0 0.0
    %604 = vmatpush1.msra.mxu0 %v579
    %605 = vmatprep.subr.mxu0 0.0
    %606 = vmatpush1.msra.mxu0 %v580
    %607 = vmatprep.subr.mxu0 0.0
    %608 = vmatpush1.msra.mxu0 %v581
    %609 = vmatprep.subr.mxu0 0.0
    %610 = vmatpush1.msra.mxu0 %v582
    %611 = vmatprep.subr.mxu0 0.0
    %612 = vmatpush1.msra.mxu0 %v583
    %613 = vmatprep.subr.mxu0 0.0
    %614 = vmatpush1.msra.mxu0 %v584
    %615 = vmatprep.subr.mxu0 0.0
    %616 = vmatpush1.msra.mxu0 %v585
    %617 = vmatprep.subr.mxu0 0.0
    %618 = vmatpush1.msra.mxu0 %v586
    %619 = vmatprep.subr.mxu0 0.0
    %620 = vmatpush1.msra.mxu0 %v587
    %621 = vmatprep.subr.mxu0 0.0
    %622 = vmatpush1.msra.mxu0 %v588
    %623 = vmatprep.subr.mxu0 0.0
    %624 = vmatpush1.msra.mxu0 %v589
    %625 = vmatprep.subr.mxu0 0.0
    %626 = vmatpush1.msra.mxu0 %v590
    %627 = vmatprep.subr.mxu0 0.0
    %628 = vmatpush1.msra.mxu0 %v591
    %629 = vmatprep.subr.mxu0 0.0
    %630 = vmatpush1.msra.mxu0 %v592
    %631 = vmatprep.subr.mxu0 0.0
    %632 = vmatpush1.msra.mxu0 %v593
    %633 = vmatprep.subr.mxu0 0.0
    %634 = vmatpush1.msra.mxu0 0.0
    %635 = vmatprep.subr.mxu0 0.0
    %636 = vmatpush1.msra.mxu0 0.0
    %637 = vmatprep.subr.mxu0 0.0
    %638 = vmatpush1.msra.mxu0 0.0
    %639 = vmatprep.subr.mxu0 0.0
    %640 = vmatpush1.msra.mxu0 0.0
    %641 = vmatprep.subr.mxu0 0.0
    %642 = vmatpush1.msra.mxu0 0.0
    %643 = vmatprep.subr.mxu0 0.0
    %644 = vmatpush1.msra.mxu0 0.0
    %645 = vmatprep.subr.mxu0 0.0
    %646 = vmatpush1.msra.mxu0 0.0
    %647 = vmatprep.subr.mxu0 0.0
    %648 = vmatpush1.msra.mxu0 0.0
    %649 = vmatprep.subr.mxu0 0.0
    %650 = vmatpush1.msra.mxu0 0.0
    %651 = vmatprep.subr.mxu0 0.0
    %652 = vmatpush1.msra.mxu0 0.0
    %653 = vmatprep.subr.mxu0 0.0
    %654 = vmatpush1.msra.mxu0 0.0
    %655 = vmatprep.subr.mxu0 0.0
    %656 = vmatpush1.msra.mxu0 0.0
    %657 = vmatprep.subr.mxu0 0.0
    %658 = vmatpush1.msra.mxu0 0.0
    %659 = vmatprep.subr.mxu0 0.0
    %660 = vmatpush1.msra.mxu0 0.0
    %661 = vmatprep.subr.mxu0 0.0
    %662 = vmatpush1.msra.mxu0 0.0
    %663 = vmatprep.subr.mxu0 0.0
    %664 = vmatpush1.msra.mxu0 0.0
    %665 = vmatprep.mubr.f32.mxu0 0.0
    %666 = vmatmul.mubr.f32.gmra.mrb[0].mxu0 %v577
    %v667 = vpop.f32.mrb[0].mxu0
    %v668 = vadd.f32 %v599, %v667
    %v669 = vpop.f32.mrb[0].mxu0
    %670 = vdwg.mxu0
    %671 = vst [vmem:[#allocation13] sm:$0xff] %v668
    // Predicated region
    $region86: #{tpu_custom_call.1} parent=1 // pred_check
      _
    $region87: #{tpu_custom_call.1} parent=1 // pred_check_branch
      %673 = sbr.rel (0) target = $region89
    $region88: #{tpu_custom_call.1} parent=1 // pred_region
      %s675 = ssub.s32 128, 128
      %676 = vsyncadd [#allocation4], %s675
      %s678 = sshll.u32 [#allocation13], 4
      %s679 = int_to_ptr.vmem [resolvable:$true] %s678
      %681 = dma.vmem_to_hbm [thread:$0]  %s679, 128, %s15, [#allocation4]
    $region89: #{tpu_custom_call.1} parent=1 // pred_fallthru
      _
    // Predicated region
    $region90: #{tpu_custom_call.1} parent=1 // pred_check
      _
    $region91: #{tpu_custom_call.1} parent=1 // pred_check_branch
      %683 = sbr.rel (0) target = $region93
    $region92: #{tpu_custom_call.1} parent=1 // pred_region
      %684 = dma.done [#allocation4], 128
    $region93: #{tpu_custom_call.1} parent=1 // pred_fallthru
      _
    %685 = vsyncpa [#allocation3], 1
    %686 = vsyncpa [#allocation6], 1
    %687 = vsyncpa [#allocation9], 1
    %688 = vsyncpa [#allocation12], 1
    %689 = vsyncpa [#allocation4], 1

</llo_original>
